<compile_context>
chip_gen: v6e
topology: v6e:2x2x1
jax: 0.10.0
libtpu: 0.0.40
codegen_flags: <defaults>
</compile_context>

<pallas_src>
import jax
import jax.numpy as jnp
import numpy as np
from jax.experimental import pallas as pl
from jax.experimental.pallas import tpu as pltpu

HIDDEN_SIZE = 2
INPUT_SIZE = 5
NUM_CLASSES = 1
NUM_LAYERS = 1          # single-layer GRU (module default)
FC1_SIZE = 128
OUT_LANES = 128         # lane-dense padded output width (sliced outside)
PACK_LANES = 128        # lane width of the packed parameter slab

# ---- packed parameter slab row offsets (per-gate, lane-offset-0 layout) ----
# gates are ordered [r, z, n] exactly as in torch.nn.GRU's weight stacking.
ROW_WIH = 0                                   # 3 gates x (I rows, H lanes)
ROW_WHH = ROW_WIH + 3 * INPUT_SIZE            # 3 gates x (H rows, H lanes)
ROW_BIAS = ROW_WHH + 3 * HIDDEN_SIZE          # b_r, b_z, b_in, b_hn  (4 rows, H lanes)
ROW_W1 = ROW_BIAS + 4                         # fc_1.weight^T  (H rows, 128 lanes)
ROW_B1 = ROW_W1 + HIDDEN_SIZE                 # fc_1.bias      (1 row, 128 lanes)
ROW_W2 = ROW_B1 + 1                           # fc.weight      (1 row, 128 lanes)
ROW_B2 = ROW_W2 + 1                           # fc.bias (scalar replicated on lanes)
P_ROWS = ((ROW_B2 + 1 + 7) // 8) * 8          # pad to a multiple of 8 sublanes -> 32


def gru1_kernel(x_ref, p_ref, out_ref):
    """Whole forward pass in one invocation (no grid).

    x_ref  : (T*B, I)   time-major rows (row t*B + b is time t, batch b)
    p_ref  : (P_ROWS, 128) packed parameter slab (see ROW_* offsets)
    out_ref: (B, 128)   lane-dense; class value replicated across lanes
    """
    B = out_ref.shape[0]
    TB, I = x_ref.shape
    T = TB // B
    H = HIDDEN_SIZE

    x = x_ref[...]                                              # (T*B, I)

    # ---- unpack parameters (static slices, prologue only, off the chain) ----
    wih_rows = []   # [gate][k] -> (1, H) input-weight row for feature k
    for g in range(3):
        base = ROW_WIH + g * I
        wih_rows.append([p_ref[base + k:base + k + 1, 0:H] for k in range(I)])
    whh_rows = []   # [gate][j] -> (1, H) hidden-weight row for hidden unit j
    for g in range(3):
        base = ROW_WHH + g * H
        whh_rows.append([p_ref[base + j:base + j + 1, 0:H] for j in range(H)])
    b_r = p_ref[ROW_BIAS + 0:ROW_BIAS + 1, 0:H]     # b_ir + b_hr (folded)
    b_z = p_ref[ROW_BIAS + 1:ROW_BIAS + 2, 0:H]     # b_iz + b_hz (folded)
    b_in = p_ref[ROW_BIAS + 2:ROW_BIAS + 3, 0:H]    # b_in  (input side of n gate)
    b_hn = p_ref[ROW_BIAS + 3:ROW_BIAS + 4, 0:H]    # b_hn  (stays inside r*(...))
    w1 = p_ref[ROW_W1:ROW_W1 + H, :]                # (H, 128)
    b1 = p_ref[ROW_B1:ROW_B1 + 1, :]                # (1, 128)
    w2 = p_ref[ROW_W2:ROW_W2 + 1, :]                # (1, 128)
    b2 = p_ref[ROW_B2:ROW_B2 + 1, :]                # (1, 128) scalar replicated

    # ---- input projection for ALL timesteps, per gate, as VPU FMAs ----------
    # gi_g = x @ Wih_g^T + bias_g, computed as I broadcast FMAs (no MXU push).
    xcols = [x[:, k:k + 1] for k in range(I)]                    # I x (T*B, 1)

    def iproj(w_rows, bias_row):
        acc = xcols[0] * w_rows[0] + bias_row
        for k in range(1, I):
            acc = acc + xcols[k] * w_rows[k]
        return acc                                               # (T*B, H)

    gi_r_all = iproj(wih_rows[0], b_r)
    gi_z_all = iproj(wih_rows[1], b_z)
    gi_n_all = iproj(wih_rows[2], b_in)

    # Per-timestep (B, H) sublane slices, hoisted (independent of h, so these
    # never lengthen the loop-carried dependency chain).
    gi_r_t = [gi_r_all[t * B:(t + 1) * B, :] for t in range(T)]
    gi_z_t = [gi_z_all[t * B:(t + 1) * B, :] for t in range(T)]
    gi_n_t = [gi_n_all[t * B:(t + 1) * B, :] for t in range(T)]

    whh_r_rows, whh_z_rows, whh_n_rows = whh_rows

    # ---- batch-vectorized, fully unrolled recurrence (MXU-free chain) -------
    h = jnp.zeros((B, H), jnp.float32)
    for t in range(T):                                           # T static
        hcols = [h[:, j:j + 1] for j in range(H)]                # (B, 1) each
        gh_r = hcols[0] * whh_r_rows[0]
        gh_z = hcols[0] * whh_z_rows[0]
        gh_n = hcols[0] * whh_n_rows[0] + b_hn
        for j in range(1, H):
            gh_r = gh_r + hcols[j] * whh_r_rows[j]
            gh_z = gh_z + hcols[j] * whh_z_rows[j]
            gh_n = gh_n + hcols[j] * whh_n_rows[j]
        r = jax.nn.sigmoid(gi_r_t[t] + gh_r)
        z = jax.nn.sigmoid(gi_z_t[t] + gh_z)
        n = jnp.tanh(gi_n_t[t] + r * gh_n)
        h = n + z * (h - n)                                      # (1-z)*n + z*h

    # ---- MLP head, batch-vectorized, no MXU, single lane-dense store --------
    hn = jnp.maximum(h, 0.0)                                     # relu
    hn_cols = [hn[:, j:j + 1] for j in range(H)]
    o1 = hn_cols[0] * w1[0:1, :] + b1                            # (B, 128)
    for j in range(1, H):
        o1 = o1 + hn_cols[j] * w1[j:j + 1, :]
    o1 = jnp.maximum(o1, 0.0)                                    # relu
    # fc (128 -> 1): elementwise multiply + lane reduction, then lane-dense.
    logit = jnp.sum(o1 * w2, axis=-1, keepdims=True)             # (B, 1)
    out_ref[...] = jnp.broadcast_to(logit, (B, OUT_LANES)) + b2  # one store


def pack_params(params):
    """Pack all GRU1 parameters into one (P_ROWS, 128) f32 slab (single DMA)."""
    wih, whh, bih, bhh, w1, b1, w2, b2 = params
    H, I, L = HIDDEN_SIZE, INPUT_SIZE, PACK_LANES

    def pad_lanes(m):
        return jnp.pad(m, ((0, 0), (0, L - m.shape[1])))

    def gate_cols(a, g):
        return a[:, g * H:(g + 1) * H]

    rows = []
    for g in range(3):
        rows.append(pad_lanes(gate_cols(wih, g)))                 # (I, 128)
    for g in range(3):
        rows.append(pad_lanes(gate_cols(whh, g)))                 # (H, 128)
    rows.append(pad_lanes(gate_cols(bih, 0) + gate_cols(bhh, 0)))  # b_r folded
    rows.append(pad_lanes(gate_cols(bih, 1) + gate_cols(bhh, 1)))  # b_z folded
    rows.append(pad_lanes(gate_cols(bih, 2)))                      # b_in
    rows.append(pad_lanes(gate_cols(bhh, 2)))                      # b_hn
    rows.append(w1)                                                # (H, 128)
    rows.append(b1)                                                # (1, 128)
    rows.append(w2)                                                # (1, 128)
    rows.append(jnp.broadcast_to(b2, (1, L)))                      # b2 replicated
    slab = jnp.concatenate(rows, axis=0)
    pad = P_ROWS - slab.shape[0]
    if pad:
        slab = jnp.pad(slab, ((0, pad), (0, 0)))
    return slab.astype(jnp.float32)


@jax.jit
def gru1_forward(x, params):
    """x: (batch, seq, input) float32; returns (batch, num_classes) float32."""
    B, T, I = x.shape
    p = pack_params(params)                                # (P_ROWS, 128), 1 DMA
    x_tm = jnp.transpose(x, (1, 0, 2)).reshape(T * B, I)   # time-major rows

    out_padded = pl.pallas_call(
        gru1_kernel,
        out_shape=jax.ShapeDtypeStruct((B, OUT_LANES), jnp.float32),
        in_specs=[pl.BlockSpec(memory_space=pltpu.MemorySpace.VMEM)] * 2,
        out_specs=pl.BlockSpec(memory_space=pltpu.MemorySpace.VMEM),
    )(x_tm, p)
    return out_padded[:, :NUM_CLASSES]


def init_params(key):
    """Deterministic synthetic parameters with PyTorch-default uniform ranges."""
    ks = jax.random.split(key, 8)
    k_gru = 1.0 / np.sqrt(HIDDEN_SIZE)
    k_fc1 = 1.0 / np.sqrt(HIDDEN_SIZE)
    k_fc = 1.0 / np.sqrt(FC1_SIZE)

    def u(k, shape, bound):
        return jax.random.uniform(k, shape, jnp.float32, -bound, bound)

    wih = u(ks[0], (INPUT_SIZE, 3 * HIDDEN_SIZE), k_gru)    # W_ih^T, gates [r,z,n]
    whh = u(ks[1], (HIDDEN_SIZE, 3 * HIDDEN_SIZE), k_gru)   # W_hh^T
    bih = u(ks[2], (1, 3 * HIDDEN_SIZE), k_gru)
    bhh = u(ks[3], (1, 3 * HIDDEN_SIZE), k_gru)
    w1 = u(ks[4], (HIDDEN_SIZE, FC1_SIZE), k_fc1)           # fc_1.weight^T
    b1 = u(ks[5], (1, FC1_SIZE), k_fc1)
    w2 = u(ks[6], (NUM_CLASSES, FC1_SIZE), k_fc)            # fc.weight (1, 128)
    b2 = u(ks[7], (1, NUM_CLASSES), k_fc)
    return (wih, whh, bih, bhh, w1, b1, w2, b2)


def gru1_reference(x, params):
    """Pure-JAX reference matching torch.nn.GRU semantics (batch_first, 1 layer)."""
    wih, whh, bih, bhh, w1, b1, w2, b2 = params
    B, T, _ = x.shape
    H = HIDDEN_SIZE
    h = jnp.zeros((B, H), jnp.float32)
    for t in range(T):
        x_t = x[:, t, :]
        gi = x_t @ wih + bih
        gh = h @ whh + bhh
        r = jax.nn.sigmoid(gi[:, 0:H] + gh[:, 0:H])
        z = jax.nn.sigmoid(gi[:, H:2 * H] + gh[:, H:2 * H])
        n = jnp.tanh(gi[:, 2 * H:3 * H] + r * gh[:, 2 * H:3 * H])
        h = (1.0 - z) * n + z * h
    hn = jnp.maximum(h, 0.0)
    o1 = jnp.maximum(hn @ w1 + b1, 0.0)
    return o1 @ w2.T + b2


if __name__ == "__main__":
    key = jax.random.PRNGKey(0)
    k_x, k_p = jax.random.split(key)

    batch, seq = 2, 8
    x = jax.random.normal(k_x, (batch, seq, INPUT_SIZE), jnp.float32)
    params = init_params(k_p)

    out = gru1_forward(x, params)
    out = jax.block_until_ready(out)

    ref = gru1_reference(x, params)
    np.testing.assert_allclose(np.asarray(out), np.asarray(ref),
                               rtol=1e-5, atol=1e-5)
    assert out.shape == (batch, NUM_CLASSES)
    print("KERNEL_OK")
</pallas_src>

<mosaic_0001>
module attributes {stable_mosaic.version = 11 : i64} {
  func.func @gru1_kernel(%arg0: memref<16x5xf32, #tpu.memory_space<vmem>>, %arg1: memref<32x128xf32, #tpu.memory_space<vmem>>, %arg2: memref<2x128xf32, #tpu.memory_space<vmem>>) attributes {dimension_semantics = [], scalar_prefetch = 0 : i64, scratch_operands = 0 : i64, tpu.core_type = #tpu.core_type<tc>} {
    %c0 = arith.constant 0 : index
    %c0_0 = arith.constant 0 : index
    %0 = vector.load %arg0[%c0, %c0_0] : memref<16x5xf32, #tpu.memory_space<vmem>>, vector<16x5xf32>
    %c0_1 = arith.constant 0 : index
    %c0_2 = arith.constant 0 : index
    %1 = vector.load %arg1[%c0_1, %c0_2] : memref<32x128xf32, #tpu.memory_space<vmem>>, vector<1x2xf32>
    %c1 = arith.constant 1 : index
    %c0_3 = arith.constant 0 : index
    %2 = vector.load %arg1[%c1, %c0_3] : memref<32x128xf32, #tpu.memory_space<vmem>>, vector<1x2xf32>
    %c2 = arith.constant 2 : index
    %c0_4 = arith.constant 0 : index
    %3 = vector.load %arg1[%c2, %c0_4] : memref<32x128xf32, #tpu.memory_space<vmem>>, vector<1x2xf32>
    %c3 = arith.constant 3 : index
    %c0_5 = arith.constant 0 : index
    %4 = vector.load %arg1[%c3, %c0_5] : memref<32x128xf32, #tpu.memory_space<vmem>>, vector<1x2xf32>
    %c4 = arith.constant 4 : index
    %c0_6 = arith.constant 0 : index
    %5 = vector.load %arg1[%c4, %c0_6] : memref<32x128xf32, #tpu.memory_space<vmem>>, vector<1x2xf32>
    %c5 = arith.constant 5 : index
    %c0_7 = arith.constant 0 : index
    %6 = vector.load %arg1[%c5, %c0_7] : memref<32x128xf32, #tpu.memory_space<vmem>>, vector<1x2xf32>
    %c6 = arith.constant 6 : index
    %c0_8 = arith.constant 0 : index
    %7 = vector.load %arg1[%c6, %c0_8] : memref<32x128xf32, #tpu.memory_space<vmem>>, vector<1x2xf32>
    %c7 = arith.constant 7 : index
    %c0_9 = arith.constant 0 : index
    %8 = vector.load %arg1[%c7, %c0_9] : memref<32x128xf32, #tpu.memory_space<vmem>>, vector<1x2xf32>
    %c8 = arith.constant 8 : index
    %c0_10 = arith.constant 0 : index
    %9 = vector.load %arg1[%c8, %c0_10] : memref<32x128xf32, #tpu.memory_space<vmem>>, vector<1x2xf32>
    %c9 = arith.constant 9 : index
    %c0_11 = arith.constant 0 : index
    %10 = vector.load %arg1[%c9, %c0_11] : memref<32x128xf32, #tpu.memory_space<vmem>>, vector<1x2xf32>
    %c10 = arith.constant 10 : index
    %c0_12 = arith.constant 0 : index
    %11 = vector.load %arg1[%c10, %c0_12] : memref<32x128xf32, #tpu.memory_space<vmem>>, vector<1x2xf32>
    %c11 = arith.constant 11 : index
    %c0_13 = arith.constant 0 : index
    %12 = vector.load %arg1[%c11, %c0_13] : memref<32x128xf32, #tpu.memory_space<vmem>>, vector<1x2xf32>
    %c12 = arith.constant 12 : index
    %c0_14 = arith.constant 0 : index
    %13 = vector.load %arg1[%c12, %c0_14] : memref<32x128xf32, #tpu.memory_space<vmem>>, vector<1x2xf32>
    %c13 = arith.constant 13 : index
    %c0_15 = arith.constant 0 : index
    %14 = vector.load %arg1[%c13, %c0_15] : memref<32x128xf32, #tpu.memory_space<vmem>>, vector<1x2xf32>
    %c14 = arith.constant 14 : index
    %c0_16 = arith.constant 0 : index
    %15 = vector.load %arg1[%c14, %c0_16] : memref<32x128xf32, #tpu.memory_space<vmem>>, vector<1x2xf32>
    %c15 = arith.constant 15 : index
    %c0_17 = arith.constant 0 : index
    %16 = vector.load %arg1[%c15, %c0_17] : memref<32x128xf32, #tpu.memory_space<vmem>>, vector<1x2xf32>
    %c16 = arith.constant 16 : index
    %c0_18 = arith.constant 0 : index
    %17 = vector.load %arg1[%c16, %c0_18] : memref<32x128xf32, #tpu.memory_space<vmem>>, vector<1x2xf32>
    %c17 = arith.constant 17 : index
    %c0_19 = arith.constant 0 : index
    %18 = vector.load %arg1[%c17, %c0_19] : memref<32x128xf32, #tpu.memory_space<vmem>>, vector<1x2xf32>
    %c18 = arith.constant 18 : index
    %c0_20 = arith.constant 0 : index
    %19 = vector.load %arg1[%c18, %c0_20] : memref<32x128xf32, #tpu.memory_space<vmem>>, vector<1x2xf32>
    %c19 = arith.constant 19 : index
    %c0_21 = arith.constant 0 : index
    %20 = vector.load %arg1[%c19, %c0_21] : memref<32x128xf32, #tpu.memory_space<vmem>>, vector<1x2xf32>
    %c20 = arith.constant 20 : index
    %c0_22 = arith.constant 0 : index
    %21 = vector.load %arg1[%c20, %c0_22] : memref<32x128xf32, #tpu.memory_space<vmem>>, vector<1x2xf32>
    %c21 = arith.constant 21 : index
    %c0_23 = arith.constant 0 : index
    %22 = vector.load %arg1[%c21, %c0_23] : memref<32x128xf32, #tpu.memory_space<vmem>>, vector<1x2xf32>
    %c22 = arith.constant 22 : index
    %c0_24 = arith.constant 0 : index
    %23 = vector.load %arg1[%c22, %c0_24] : memref<32x128xf32, #tpu.memory_space<vmem>>, vector<1x2xf32>
    %c23 = arith.constant 23 : index
    %c0_25 = arith.constant 0 : index
    %24 = vector.load %arg1[%c23, %c0_25] : memref<32x128xf32, #tpu.memory_space<vmem>>, vector<1x2xf32>
    %c24 = arith.constant 24 : index
    %c0_26 = arith.constant 0 : index
    %25 = vector.load %arg1[%c24, %c0_26] : memref<32x128xf32, #tpu.memory_space<vmem>>, vector<1x2xf32>
    %c25 = arith.constant 25 : index
    %c0_27 = arith.constant 0 : index
    %26 = vector.load %arg1[%c25, %c0_27] : memref<32x128xf32, #tpu.memory_space<vmem>>, vector<2x128xf32>
    %c27 = arith.constant 27 : index
    %c0_28 = arith.constant 0 : index
    %27 = vector.load %arg1[%c27, %c0_28] : memref<32x128xf32, #tpu.memory_space<vmem>>, vector<1x128xf32>
    %c28 = arith.constant 28 : index
    %c0_29 = arith.constant 0 : index
    %28 = vector.load %arg1[%c28, %c0_29] : memref<32x128xf32, #tpu.memory_space<vmem>>, vector<1x128xf32>
    %c29 = arith.constant 29 : index
    %c0_30 = arith.constant 0 : index
    %29 = vector.load %arg1[%c29, %c0_30] : memref<32x128xf32, #tpu.memory_space<vmem>>, vector<1x128xf32>
    %30 = vector.extract_strided_slice %0 {offsets = [0, 0], sizes = [16, 1], strides = [1, 1]} : vector<16x5xf32> to vector<16x1xf32>
    %31 = vector.extract_strided_slice %0 {offsets = [0, 1], sizes = [16, 1], strides = [1, 1]} : vector<16x5xf32> to vector<16x1xf32>
    %32 = vector.extract_strided_slice %0 {offsets = [0, 2], sizes = [16, 1], strides = [1, 1]} : vector<16x5xf32> to vector<16x1xf32>
    %33 = vector.extract_strided_slice %0 {offsets = [0, 3], sizes = [16, 1], strides = [1, 1]} : vector<16x5xf32> to vector<16x1xf32>
    %34 = vector.extract_strided_slice %0 {offsets = [0, 4], sizes = [16, 1], strides = [1, 1]} : vector<16x5xf32> to vector<16x1xf32>
    %35 = vector.broadcast %30 : vector<16x1xf32> to vector<16x2xf32>
    %36 = vector.broadcast %1 : vector<1x2xf32> to vector<16x2xf32>
    %37 = arith.mulf %35, %36 : vector<16x2xf32>
    %38 = vector.broadcast %22 : vector<1x2xf32> to vector<16x2xf32>
    %39 = arith.addf %37, %38 : vector<16x2xf32>
    %40 = vector.broadcast %31 : vector<16x1xf32> to vector<16x2xf32>
    %41 = vector.broadcast %2 : vector<1x2xf32> to vector<16x2xf32>
    %42 = arith.mulf %40, %41 : vector<16x2xf32>
    %43 = arith.addf %39, %42 : vector<16x2xf32>
    %44 = vector.broadcast %32 : vector<16x1xf32> to vector<16x2xf32>
    %45 = vector.broadcast %3 : vector<1x2xf32> to vector<16x2xf32>
    %46 = arith.mulf %44, %45 : vector<16x2xf32>
    %47 = arith.addf %43, %46 : vector<16x2xf32>
    %48 = vector.broadcast %33 : vector<16x1xf32> to vector<16x2xf32>
    %49 = vector.broadcast %4 : vector<1x2xf32> to vector<16x2xf32>
    %50 = arith.mulf %48, %49 : vector<16x2xf32>
    %51 = arith.addf %47, %50 : vector<16x2xf32>
    %52 = vector.broadcast %34 : vector<16x1xf32> to vector<16x2xf32>
    %53 = vector.broadcast %5 : vector<1x2xf32> to vector<16x2xf32>
    %54 = arith.mulf %52, %53 : vector<16x2xf32>
    %55 = arith.addf %51, %54 : vector<16x2xf32>
    %56 = vector.broadcast %30 : vector<16x1xf32> to vector<16x2xf32>
    %57 = vector.broadcast %6 : vector<1x2xf32> to vector<16x2xf32>
    %58 = arith.mulf %56, %57 : vector<16x2xf32>
    %59 = vector.broadcast %23 : vector<1x2xf32> to vector<16x2xf32>
    %60 = arith.addf %58, %59 : vector<16x2xf32>
    %61 = vector.broadcast %31 : vector<16x1xf32> to vector<16x2xf32>
    %62 = vector.broadcast %7 : vector<1x2xf32> to vector<16x2xf32>
    %63 = arith.mulf %61, %62 : vector<16x2xf32>
    %64 = arith.addf %60, %63 : vector<16x2xf32>
    %65 = vector.broadcast %32 : vector<16x1xf32> to vector<16x2xf32>
    %66 = vector.broadcast %8 : vector<1x2xf32> to vector<16x2xf32>
    %67 = arith.mulf %65, %66 : vector<16x2xf32>
    %68 = arith.addf %64, %67 : vector<16x2xf32>
    %69 = vector.broadcast %33 : vector<16x1xf32> to vector<16x2xf32>
    %70 = vector.broadcast %9 : vector<1x2xf32> to vector<16x2xf32>
    %71 = arith.mulf %69, %70 : vector<16x2xf32>
    %72 = arith.addf %68, %71 : vector<16x2xf32>
    %73 = vector.broadcast %34 : vector<16x1xf32> to vector<16x2xf32>
    %74 = vector.broadcast %10 : vector<1x2xf32> to vector<16x2xf32>
    %75 = arith.mulf %73, %74 : vector<16x2xf32>
    %76 = arith.addf %72, %75 : vector<16x2xf32>
    %77 = vector.broadcast %30 : vector<16x1xf32> to vector<16x2xf32>
    %78 = vector.broadcast %11 : vector<1x2xf32> to vector<16x2xf32>
    %79 = arith.mulf %77, %78 : vector<16x2xf32>
    %80 = vector.broadcast %24 : vector<1x2xf32> to vector<16x2xf32>
    %81 = arith.addf %79, %80 : vector<16x2xf32>
    %82 = vector.broadcast %31 : vector<16x1xf32> to vector<16x2xf32>
    %83 = vector.broadcast %12 : vector<1x2xf32> to vector<16x2xf32>
    %84 = arith.mulf %82, %83 : vector<16x2xf32>
    %85 = arith.addf %81, %84 : vector<16x2xf32>
    %86 = vector.broadcast %32 : vector<16x1xf32> to vector<16x2xf32>
    %87 = vector.broadcast %13 : vector<1x2xf32> to vector<16x2xf32>
    %88 = arith.mulf %86, %87 : vector<16x2xf32>
    %89 = arith.addf %85, %88 : vector<16x2xf32>
    %90 = vector.broadcast %33 : vector<16x1xf32> to vector<16x2xf32>
    %91 = vector.broadcast %14 : vector<1x2xf32> to vector<16x2xf32>
    %92 = arith.mulf %90, %91 : vector<16x2xf32>
    %93 = arith.addf %89, %92 : vector<16x2xf32>
    %94 = vector.broadcast %34 : vector<16x1xf32> to vector<16x2xf32>
    %95 = vector.broadcast %15 : vector<1x2xf32> to vector<16x2xf32>
    %96 = arith.mulf %94, %95 : vector<16x2xf32>
    %97 = arith.addf %93, %96 : vector<16x2xf32>
    %98 = vector.extract_strided_slice %55 {offsets = [0, 0], sizes = [2, 2], strides = [1, 1]} : vector<16x2xf32> to vector<2x2xf32>
    %99 = vector.extract_strided_slice %55 {offsets = [2, 0], sizes = [2, 2], strides = [1, 1]} : vector<16x2xf32> to vector<2x2xf32>
    %100 = vector.extract_strided_slice %55 {offsets = [4, 0], sizes = [2, 2], strides = [1, 1]} : vector<16x2xf32> to vector<2x2xf32>
    %101 = vector.extract_strided_slice %55 {offsets = [6, 0], sizes = [2, 2], strides = [1, 1]} : vector<16x2xf32> to vector<2x2xf32>
    %102 = vector.extract_strided_slice %55 {offsets = [8, 0], sizes = [2, 2], strides = [1, 1]} : vector<16x2xf32> to vector<2x2xf32>
    %103 = vector.extract_strided_slice %55 {offsets = [10, 0], sizes = [2, 2], strides = [1, 1]} : vector<16x2xf32> to vector<2x2xf32>
    %104 = vector.extract_strided_slice %55 {offsets = [12, 0], sizes = [2, 2], strides = [1, 1]} : vector<16x2xf32> to vector<2x2xf32>
    %105 = vector.extract_strided_slice %55 {offsets = [14, 0], sizes = [2, 2], strides = [1, 1]} : vector<16x2xf32> to vector<2x2xf32>
    %106 = vector.extract_strided_slice %76 {offsets = [0, 0], sizes = [2, 2], strides = [1, 1]} : vector<16x2xf32> to vector<2x2xf32>
    %107 = vector.extract_strided_slice %76 {offsets = [2, 0], sizes = [2, 2], strides = [1, 1]} : vector<16x2xf32> to vector<2x2xf32>
    %108 = vector.extract_strided_slice %76 {offsets = [4, 0], sizes = [2, 2], strides = [1, 1]} : vector<16x2xf32> to vector<2x2xf32>
    %109 = vector.extract_strided_slice %76 {offsets = [6, 0], sizes = [2, 2], strides = [1, 1]} : vector<16x2xf32> to vector<2x2xf32>
    %110 = vector.extract_strided_slice %76 {offsets = [8, 0], sizes = [2, 2], strides = [1, 1]} : vector<16x2xf32> to vector<2x2xf32>
    %111 = vector.extract_strided_slice %76 {offsets = [10, 0], sizes = [2, 2], strides = [1, 1]} : vector<16x2xf32> to vector<2x2xf32>
    %112 = vector.extract_strided_slice %76 {offsets = [12, 0], sizes = [2, 2], strides = [1, 1]} : vector<16x2xf32> to vector<2x2xf32>
    %113 = vector.extract_strided_slice %76 {offsets = [14, 0], sizes = [2, 2], strides = [1, 1]} : vector<16x2xf32> to vector<2x2xf32>
    %114 = vector.extract_strided_slice %97 {offsets = [0, 0], sizes = [2, 2], strides = [1, 1]} : vector<16x2xf32> to vector<2x2xf32>
    %115 = vector.extract_strided_slice %97 {offsets = [2, 0], sizes = [2, 2], strides = [1, 1]} : vector<16x2xf32> to vector<2x2xf32>
    %116 = vector.extract_strided_slice %97 {offsets = [4, 0], sizes = [2, 2], strides = [1, 1]} : vector<16x2xf32> to vector<2x2xf32>
    %117 = vector.extract_strided_slice %97 {offsets = [6, 0], sizes = [2, 2], strides = [1, 1]} : vector<16x2xf32> to vector<2x2xf32>
    %118 = vector.extract_strided_slice %97 {offsets = [8, 0], sizes = [2, 2], strides = [1, 1]} : vector<16x2xf32> to vector<2x2xf32>
    %119 = vector.extract_strided_slice %97 {offsets = [10, 0], sizes = [2, 2], strides = [1, 1]} : vector<16x2xf32> to vector<2x2xf32>
    %120 = vector.extract_strided_slice %97 {offsets = [12, 0], sizes = [2, 2], strides = [1, 1]} : vector<16x2xf32> to vector<2x2xf32>
    %121 = vector.extract_strided_slice %97 {offsets = [14, 0], sizes = [2, 2], strides = [1, 1]} : vector<16x2xf32> to vector<2x2xf32>
    %cst = arith.constant 0.000000e+00 : f32
    %122 = vector.broadcast %cst : f32 to vector<2x2xf32>
    %123 = vector.extract_strided_slice %122 {offsets = [0, 0], sizes = [2, 1], strides = [1, 1]} : vector<2x2xf32> to vector<2x1xf32>
    %124 = vector.extract_strided_slice %122 {offsets = [0, 1], sizes = [2, 1], strides = [1, 1]} : vector<2x2xf32> to vector<2x1xf32>
    %125 = vector.broadcast %123 : vector<2x1xf32> to vector<2x2xf32>
    %126 = vector.broadcast %16 : vector<1x2xf32> to vector<2x2xf32>
    %127 = arith.mulf %125, %126 : vector<2x2xf32>
    %128 = vector.broadcast %123 : vector<2x1xf32> to vector<2x2xf32>
    %129 = vector.broadcast %18 : vector<1x2xf32> to vector<2x2xf32>
    %130 = arith.mulf %128, %129 : vector<2x2xf32>
    %131 = vector.broadcast %123 : vector<2x1xf32> to vector<2x2xf32>
    %132 = vector.broadcast %20 : vector<1x2xf32> to vector<2x2xf32>
    %133 = arith.mulf %131, %132 : vector<2x2xf32>
    %134 = vector.broadcast %25 : vector<1x2xf32> to vector<2x2xf32>
    %135 = arith.addf %133, %134 : vector<2x2xf32>
    %136 = vector.broadcast %124 : vector<2x1xf32> to vector<2x2xf32>
    %137 = vector.broadcast %17 : vector<1x2xf32> to vector<2x2xf32>
    %138 = arith.mulf %136, %137 : vector<2x2xf32>
    %139 = arith.addf %127, %138 : vector<2x2xf32>
    %140 = vector.broadcast %124 : vector<2x1xf32> to vector<2x2xf32>
    %141 = vector.broadcast %19 : vector<1x2xf32> to vector<2x2xf32>
    %142 = arith.mulf %140, %141 : vector<2x2xf32>
    %143 = arith.addf %130, %142 : vector<2x2xf32>
    %144 = vector.broadcast %124 : vector<2x1xf32> to vector<2x2xf32>
    %145 = vector.broadcast %21 : vector<1x2xf32> to vector<2x2xf32>
    %146 = arith.mulf %144, %145 : vector<2x2xf32>
    %147 = arith.addf %135, %146 : vector<2x2xf32>
    %148 = arith.addf %98, %139 : vector<2x2xf32>
    %149 = arith.negf %148 : vector<2x2xf32>
    %150 = math.exp %149 : vector<2x2xf32>
    %cst_31 = arith.constant 1.000000e+00 : f32
    %151 = vector.broadcast %cst_31 : f32 to vector<2x2xf32>
    %152 = arith.addf %151, %150 : vector<2x2xf32>
    %153 = arith.divf %151, %152 : vector<2x2xf32>
    %154 = arith.addf %106, %143 : vector<2x2xf32>
    %155 = arith.negf %154 : vector<2x2xf32>
    %156 = math.exp %155 : vector<2x2xf32>
    %cst_32 = arith.constant 1.000000e+00 : f32
    %157 = vector.broadcast %cst_32 : f32 to vector<2x2xf32>
    %158 = arith.addf %157, %156 : vector<2x2xf32>
    %159 = arith.divf %157, %158 : vector<2x2xf32>
    %160 = arith.mulf %153, %147 : vector<2x2xf32>
    %161 = arith.addf %114, %160 : vector<2x2xf32>
    %162 = math.tanh %161 : vector<2x2xf32>
    %163 = arith.subf %122, %162 : vector<2x2xf32>
    %164 = arith.mulf %159, %163 : vector<2x2xf32>
    %165 = arith.addf %162, %164 : vector<2x2xf32>
    %166 = vector.extract_strided_slice %165 {offsets = [0, 0], sizes = [2, 1], strides = [1, 1]} : vector<2x2xf32> to vector<2x1xf32>
    %167 = vector.extract_strided_slice %165 {offsets = [0, 1], sizes = [2, 1], strides = [1, 1]} : vector<2x2xf32> to vector<2x1xf32>
    %168 = vector.broadcast %166 : vector<2x1xf32> to vector<2x2xf32>
    %169 = vector.broadcast %16 : vector<1x2xf32> to vector<2x2xf32>
    %170 = arith.mulf %168, %169 : vector<2x2xf32>
    %171 = vector.broadcast %166 : vector<2x1xf32> to vector<2x2xf32>
    %172 = vector.broadcast %18 : vector<1x2xf32> to vector<2x2xf32>
    %173 = arith.mulf %171, %172 : vector<2x2xf32>
    %174 = vector.broadcast %166 : vector<2x1xf32> to vector<2x2xf32>
    %175 = vector.broadcast %20 : vector<1x2xf32> to vector<2x2xf32>
    %176 = arith.mulf %174, %175 : vector<2x2xf32>
    %177 = vector.broadcast %25 : vector<1x2xf32> to vector<2x2xf32>
    %178 = arith.addf %176, %177 : vector<2x2xf32>
    %179 = vector.broadcast %167 : vector<2x1xf32> to vector<2x2xf32>
    %180 = vector.broadcast %17 : vector<1x2xf32> to vector<2x2xf32>
    %181 = arith.mulf %179, %180 : vector<2x2xf32>
    %182 = arith.addf %170, %181 : vector<2x2xf32>
    %183 = vector.broadcast %167 : vector<2x1xf32> to vector<2x2xf32>
    %184 = vector.broadcast %19 : vector<1x2xf32> to vector<2x2xf32>
    %185 = arith.mulf %183, %184 : vector<2x2xf32>
    %186 = arith.addf %173, %185 : vector<2x2xf32>
    %187 = vector.broadcast %167 : vector<2x1xf32> to vector<2x2xf32>
    %188 = vector.broadcast %21 : vector<1x2xf32> to vector<2x2xf32>
    %189 = arith.mulf %187, %188 : vector<2x2xf32>
    %190 = arith.addf %178, %189 : vector<2x2xf32>
    %191 = arith.addf %99, %182 : vector<2x2xf32>
    %192 = arith.negf %191 : vector<2x2xf32>
    %193 = math.exp %192 : vector<2x2xf32>
    %cst_33 = arith.constant 1.000000e+00 : f32
    %194 = vector.broadcast %cst_33 : f32 to vector<2x2xf32>
    %195 = arith.addf %194, %193 : vector<2x2xf32>
    %196 = arith.divf %194, %195 : vector<2x2xf32>
    %197 = arith.addf %107, %186 : vector<2x2xf32>
    %198 = arith.negf %197 : vector<2x2xf32>
    %199 = math.exp %198 : vector<2x2xf32>
    %cst_34 = arith.constant 1.000000e+00 : f32
    %200 = vector.broadcast %cst_34 : f32 to vector<2x2xf32>
    %201 = arith.addf %200, %199 : vector<2x2xf32>
    %202 = arith.divf %200, %201 : vector<2x2xf32>
    %203 = arith.mulf %196, %190 : vector<2x2xf32>
    %204 = arith.addf %115, %203 : vector<2x2xf32>
    %205 = math.tanh %204 : vector<2x2xf32>
    %206 = arith.subf %165, %205 : vector<2x2xf32>
    %207 = arith.mulf %202, %206 : vector<2x2xf32>
    %208 = arith.addf %205, %207 : vector<2x2xf32>
    %209 = vector.extract_strided_slice %208 {offsets = [0, 0], sizes = [2, 1], strides = [1, 1]} : vector<2x2xf32> to vector<2x1xf32>
    %210 = vector.extract_strided_slice %208 {offsets = [0, 1], sizes = [2, 1], strides = [1, 1]} : vector<2x2xf32> to vector<2x1xf32>
    %211 = vector.broadcast %209 : vector<2x1xf32> to vector<2x2xf32>
    %212 = vector.broadcast %16 : vector<1x2xf32> to vector<2x2xf32>
    %213 = arith.mulf %211, %212 : vector<2x2xf32>
    %214 = vector.broadcast %209 : vector<2x1xf32> to vector<2x2xf32>
    %215 = vector.broadcast %18 : vector<1x2xf32> to vector<2x2xf32>
    %216 = arith.mulf %214, %215 : vector<2x2xf32>
    %217 = vector.broadcast %209 : vector<2x1xf32> to vector<2x2xf32>
    %218 = vector.broadcast %20 : vector<1x2xf32> to vector<2x2xf32>
    %219 = arith.mulf %217, %218 : vector<2x2xf32>
    %220 = vector.broadcast %25 : vector<1x2xf32> to vector<2x2xf32>
    %221 = arith.addf %219, %220 : vector<2x2xf32>
    %222 = vector.broadcast %210 : vector<2x1xf32> to vector<2x2xf32>
    %223 = vector.broadcast %17 : vector<1x2xf32> to vector<2x2xf32>
    %224 = arith.mulf %222, %223 : vector<2x2xf32>
    %225 = arith.addf %213, %224 : vector<2x2xf32>
    %226 = vector.broadcast %210 : vector<2x1xf32> to vector<2x2xf32>
    %227 = vector.broadcast %19 : vector<1x2xf32> to vector<2x2xf32>
    %228 = arith.mulf %226, %227 : vector<2x2xf32>
    %229 = arith.addf %216, %228 : vector<2x2xf32>
    %230 = vector.broadcast %210 : vector<2x1xf32> to vector<2x2xf32>
    %231 = vector.broadcast %21 : vector<1x2xf32> to vector<2x2xf32>
    %232 = arith.mulf %230, %231 : vector<2x2xf32>
    %233 = arith.addf %221, %232 : vector<2x2xf32>
    %234 = arith.addf %100, %225 : vector<2x2xf32>
    %235 = arith.negf %234 : vector<2x2xf32>
    %236 = math.exp %235 : vector<2x2xf32>
    %cst_35 = arith.constant 1.000000e+00 : f32
    %237 = vector.broadcast %cst_35 : f32 to vector<2x2xf32>
    %238 = arith.addf %237, %236 : vector<2x2xf32>
    %239 = arith.divf %237, %238 : vector<2x2xf32>
    %240 = arith.addf %108, %229 : vector<2x2xf32>
    %241 = arith.negf %240 : vector<2x2xf32>
    %242 = math.exp %241 : vector<2x2xf32>
    %cst_36 = arith.constant 1.000000e+00 : f32
    %243 = vector.broadcast %cst_36 : f32 to vector<2x2xf32>
    %244 = arith.addf %243, %242 : vector<2x2xf32>
    %245 = arith.divf %243, %244 : vector<2x2xf32>
    %246 = arith.mulf %239, %233 : vector<2x2xf32>
    %247 = arith.addf %116, %246 : vector<2x2xf32>
    %248 = math.tanh %247 : vector<2x2xf32>
    %249 = arith.subf %208, %248 : vector<2x2xf32>
    %250 = arith.mulf %245, %249 : vector<2x2xf32>
    %251 = arith.addf %248, %250 : vector<2x2xf32>
    %252 = vector.extract_strided_slice %251 {offsets = [0, 0], sizes = [2, 1], strides = [1, 1]} : vector<2x2xf32> to vector<2x1xf32>
    %253 = vector.extract_strided_slice %251 {offsets = [0, 1], sizes = [2, 1], strides = [1, 1]} : vector<2x2xf32> to vector<2x1xf32>
    %254 = vector.broadcast %252 : vector<2x1xf32> to vector<2x2xf32>
    %255 = vector.broadcast %16 : vector<1x2xf32> to vector<2x2xf32>
    %256 = arith.mulf %254, %255 : vector<2x2xf32>
    %257 = vector.broadcast %252 : vector<2x1xf32> to vector<2x2xf32>
    %258 = vector.broadcast %18 : vector<1x2xf32> to vector<2x2xf32>
    %259 = arith.mulf %257, %258 : vector<2x2xf32>
    %260 = vector.broadcast %252 : vector<2x1xf32> to vector<2x2xf32>
    %261 = vector.broadcast %20 : vector<1x2xf32> to vector<2x2xf32>
    %262 = arith.mulf %260, %261 : vector<2x2xf32>
    %263 = vector.broadcast %25 : vector<1x2xf32> to vector<2x2xf32>
    %264 = arith.addf %262, %263 : vector<2x2xf32>
    %265 = vector.broadcast %253 : vector<2x1xf32> to vector<2x2xf32>
    %266 = vector.broadcast %17 : vector<1x2xf32> to vector<2x2xf32>
    %267 = arith.mulf %265, %266 : vector<2x2xf32>
    %268 = arith.addf %256, %267 : vector<2x2xf32>
    %269 = vector.broadcast %253 : vector<2x1xf32> to vector<2x2xf32>
    %270 = vector.broadcast %19 : vector<1x2xf32> to vector<2x2xf32>
    %271 = arith.mulf %269, %270 : vector<2x2xf32>
    %272 = arith.addf %259, %271 : vector<2x2xf32>
    %273 = vector.broadcast %253 : vector<2x1xf32> to vector<2x2xf32>
    %274 = vector.broadcast %21 : vector<1x2xf32> to vector<2x2xf32>
    %275 = arith.mulf %273, %274 : vector<2x2xf32>
    %276 = arith.addf %264, %275 : vector<2x2xf32>
    %277 = arith.addf %101, %268 : vector<2x2xf32>
    %278 = arith.negf %277 : vector<2x2xf32>
    %279 = math.exp %278 : vector<2x2xf32>
    %cst_37 = arith.constant 1.000000e+00 : f32
    %280 = vector.broadcast %cst_37 : f32 to vector<2x2xf32>
    %281 = arith.addf %280, %279 : vector<2x2xf32>
    %282 = arith.divf %280, %281 : vector<2x2xf32>
    %283 = arith.addf %109, %272 : vector<2x2xf32>
    %284 = arith.negf %283 : vector<2x2xf32>
    %285 = math.exp %284 : vector<2x2xf32>
    %cst_38 = arith.constant 1.000000e+00 : f32
    %286 = vector.broadcast %cst_38 : f32 to vector<2x2xf32>
    %287 = arith.addf %286, %285 : vector<2x2xf32>
    %288 = arith.divf %286, %287 : vector<2x2xf32>
    %289 = arith.mulf %282, %276 : vector<2x2xf32>
    %290 = arith.addf %117, %289 : vector<2x2xf32>
    %291 = math.tanh %290 : vector<2x2xf32>
    %292 = arith.subf %251, %291 : vector<2x2xf32>
    %293 = arith.mulf %288, %292 : vector<2x2xf32>
    %294 = arith.addf %291, %293 : vector<2x2xf32>
    %295 = vector.extract_strided_slice %294 {offsets = [0, 0], sizes = [2, 1], strides = [1, 1]} : vector<2x2xf32> to vector<2x1xf32>
    %296 = vector.extract_strided_slice %294 {offsets = [0, 1], sizes = [2, 1], strides = [1, 1]} : vector<2x2xf32> to vector<2x1xf32>
    %297 = vector.broadcast %295 : vector<2x1xf32> to vector<2x2xf32>
    %298 = vector.broadcast %16 : vector<1x2xf32> to vector<2x2xf32>
    %299 = arith.mulf %297, %298 : vector<2x2xf32>
    %300 = vector.broadcast %295 : vector<2x1xf32> to vector<2x2xf32>
    %301 = vector.broadcast %18 : vector<1x2xf32> to vector<2x2xf32>
    %302 = arith.mulf %300, %301 : vector<2x2xf32>
    %303 = vector.broadcast %295 : vector<2x1xf32> to vector<2x2xf32>
    %304 = vector.broadcast %20 : vector<1x2xf32> to vector<2x2xf32>
    %305 = arith.mulf %303, %304 : vector<2x2xf32>
    %306 = vector.broadcast %25 : vector<1x2xf32> to vector<2x2xf32>
    %307 = arith.addf %305, %306 : vector<2x2xf32>
    %308 = vector.broadcast %296 : vector<2x1xf32> to vector<2x2xf32>
    %309 = vector.broadcast %17 : vector<1x2xf32> to vector<2x2xf32>
    %310 = arith.mulf %308, %309 : vector<2x2xf32>
    %311 = arith.addf %299, %310 : vector<2x2xf32>
    %312 = vector.broadcast %296 : vector<2x1xf32> to vector<2x2xf32>
    %313 = vector.broadcast %19 : vector<1x2xf32> to vector<2x2xf32>
    %314 = arith.mulf %312, %313 : vector<2x2xf32>
    %315 = arith.addf %302, %314 : vector<2x2xf32>
    %316 = vector.broadcast %296 : vector<2x1xf32> to vector<2x2xf32>
    %317 = vector.broadcast %21 : vector<1x2xf32> to vector<2x2xf32>
    %318 = arith.mulf %316, %317 : vector<2x2xf32>
    %319 = arith.addf %307, %318 : vector<2x2xf32>
    %320 = arith.addf %102, %311 : vector<2x2xf32>
    %321 = arith.negf %320 : vector<2x2xf32>
    %322 = math.exp %321 : vector<2x2xf32>
    %cst_39 = arith.constant 1.000000e+00 : f32
    %323 = vector.broadcast %cst_39 : f32 to vector<2x2xf32>
    %324 = arith.addf %323, %322 : vector<2x2xf32>
    %325 = arith.divf %323, %324 : vector<2x2xf32>
    %326 = arith.addf %110, %315 : vector<2x2xf32>
    %327 = arith.negf %326 : vector<2x2xf32>
    %328 = math.exp %327 : vector<2x2xf32>
    %cst_40 = arith.constant 1.000000e+00 : f32
    %329 = vector.broadcast %cst_40 : f32 to vector<2x2xf32>
    %330 = arith.addf %329, %328 : vector<2x2xf32>
    %331 = arith.divf %329, %330 : vector<2x2xf32>
    %332 = arith.mulf %325, %319 : vector<2x2xf32>
    %333 = arith.addf %118, %332 : vector<2x2xf32>
    %334 = math.tanh %333 : vector<2x2xf32>
    %335 = arith.subf %294, %334 : vector<2x2xf32>
    %336 = arith.mulf %331, %335 : vector<2x2xf32>
    %337 = arith.addf %334, %336 : vector<2x2xf32>
    %338 = vector.extract_strided_slice %337 {offsets = [0, 0], sizes = [2, 1], strides = [1, 1]} : vector<2x2xf32> to vector<2x1xf32>
    %339 = vector.extract_strided_slice %337 {offsets = [0, 1], sizes = [2, 1], strides = [1, 1]} : vector<2x2xf32> to vector<2x1xf32>
    %340 = vector.broadcast %338 : vector<2x1xf32> to vector<2x2xf32>
    %341 = vector.broadcast %16 : vector<1x2xf32> to vector<2x2xf32>
    %342 = arith.mulf %340, %341 : vector<2x2xf32>
    %343 = vector.broadcast %338 : vector<2x1xf32> to vector<2x2xf32>
    %344 = vector.broadcast %18 : vector<1x2xf32> to vector<2x2xf32>
    %345 = arith.mulf %343, %344 : vector<2x2xf32>
    %346 = vector.broadcast %338 : vector<2x1xf32> to vector<2x2xf32>
    %347 = vector.broadcast %20 : vector<1x2xf32> to vector<2x2xf32>
    %348 = arith.mulf %346, %347 : vector<2x2xf32>
    %349 = vector.broadcast %25 : vector<1x2xf32> to vector<2x2xf32>
    %350 = arith.addf %348, %349 : vector<2x2xf32>
    %351 = vector.broadcast %339 : vector<2x1xf32> to vector<2x2xf32>
    %352 = vector.broadcast %17 : vector<1x2xf32> to vector<2x2xf32>
    %353 = arith.mulf %351, %352 : vector<2x2xf32>
    %354 = arith.addf %342, %353 : vector<2x2xf32>
    %355 = vector.broadcast %339 : vector<2x1xf32> to vector<2x2xf32>
    %356 = vector.broadcast %19 : vector<1x2xf32> to vector<2x2xf32>
    %357 = arith.mulf %355, %356 : vector<2x2xf32>
    %358 = arith.addf %345, %357 : vector<2x2xf32>
    %359 = vector.broadcast %339 : vector<2x1xf32> to vector<2x2xf32>
    %360 = vector.broadcast %21 : vector<1x2xf32> to vector<2x2xf32>
    %361 = arith.mulf %359, %360 : vector<2x2xf32>
    %362 = arith.addf %350, %361 : vector<2x2xf32>
    %363 = arith.addf %103, %354 : vector<2x2xf32>
    %364 = arith.negf %363 : vector<2x2xf32>
    %365 = math.exp %364 : vector<2x2xf32>
    %cst_41 = arith.constant 1.000000e+00 : f32
    %366 = vector.broadcast %cst_41 : f32 to vector<2x2xf32>
    %367 = arith.addf %366, %365 : vector<2x2xf32>
    %368 = arith.divf %366, %367 : vector<2x2xf32>
    %369 = arith.addf %111, %358 : vector<2x2xf32>
    %370 = arith.negf %369 : vector<2x2xf32>
    %371 = math.exp %370 : vector<2x2xf32>
    %cst_42 = arith.constant 1.000000e+00 : f32
    %372 = vector.broadcast %cst_42 : f32 to vector<2x2xf32>
    %373 = arith.addf %372, %371 : vector<2x2xf32>
    %374 = arith.divf %372, %373 : vector<2x2xf32>
    %375 = arith.mulf %368, %362 : vector<2x2xf32>
    %376 = arith.addf %119, %375 : vector<2x2xf32>
    %377 = math.tanh %376 : vector<2x2xf32>
    %378 = arith.subf %337, %377 : vector<2x2xf32>
    %379 = arith.mulf %374, %378 : vector<2x2xf32>
    %380 = arith.addf %377, %379 : vector<2x2xf32>
    %381 = vector.extract_strided_slice %380 {offsets = [0, 0], sizes = [2, 1], strides = [1, 1]} : vector<2x2xf32> to vector<2x1xf32>
    %382 = vector.extract_strided_slice %380 {offsets = [0, 1], sizes = [2, 1], strides = [1, 1]} : vector<2x2xf32> to vector<2x1xf32>
    %383 = vector.broadcast %381 : vector<2x1xf32> to vector<2x2xf32>
    %384 = vector.broadcast %16 : vector<1x2xf32> to vector<2x2xf32>
    %385 = arith.mulf %383, %384 : vector<2x2xf32>
    %386 = vector.broadcast %381 : vector<2x1xf32> to vector<2x2xf32>
    %387 = vector.broadcast %18 : vector<1x2xf32> to vector<2x2xf32>
    %388 = arith.mulf %386, %387 : vector<2x2xf32>
    %389 = vector.broadcast %381 : vector<2x1xf32> to vector<2x2xf32>
    %390 = vector.broadcast %20 : vector<1x2xf32> to vector<2x2xf32>
    %391 = arith.mulf %389, %390 : vector<2x2xf32>
    %392 = vector.broadcast %25 : vector<1x2xf32> to vector<2x2xf32>
    %393 = arith.addf %391, %392 : vector<2x2xf32>
    %394 = vector.broadcast %382 : vector<2x1xf32> to vector<2x2xf32>
    %395 = vector.broadcast %17 : vector<1x2xf32> to vector<2x2xf32>
    %396 = arith.mulf %394, %395 : vector<2x2xf32>
    %397 = arith.addf %385, %396 : vector<2x2xf32>
    %398 = vector.broadcast %382 : vector<2x1xf32> to vector<2x2xf32>
    %399 = vector.broadcast %19 : vector<1x2xf32> to vector<2x2xf32>
    %400 = arith.mulf %398, %399 : vector<2x2xf32>
    %401 = arith.addf %388, %400 : vector<2x2xf32>
    %402 = vector.broadcast %382 : vector<2x1xf32> to vector<2x2xf32>
    %403 = vector.broadcast %21 : vector<1x2xf32> to vector<2x2xf32>
    %404 = arith.mulf %402, %403 : vector<2x2xf32>
    %405 = arith.addf %393, %404 : vector<2x2xf32>
    %406 = arith.addf %104, %397 : vector<2x2xf32>
    %407 = arith.negf %406 : vector<2x2xf32>
    %408 = math.exp %407 : vector<2x2xf32>
    %cst_43 = arith.constant 1.000000e+00 : f32
    %409 = vector.broadcast %cst_43 : f32 to vector<2x2xf32>
    %410 = arith.addf %409, %408 : vector<2x2xf32>
    %411 = arith.divf %409, %410 : vector<2x2xf32>
    %412 = arith.addf %112, %401 : vector<2x2xf32>
    %413 = arith.negf %412 : vector<2x2xf32>
    %414 = math.exp %413 : vector<2x2xf32>
    %cst_44 = arith.constant 1.000000e+00 : f32
    %415 = vector.broadcast %cst_44 : f32 to vector<2x2xf32>
    %416 = arith.addf %415, %414 : vector<2x2xf32>
    %417 = arith.divf %415, %416 : vector<2x2xf32>
    %418 = arith.mulf %411, %405 : vector<2x2xf32>
    %419 = arith.addf %120, %418 : vector<2x2xf32>
    %420 = math.tanh %419 : vector<2x2xf32>
    %421 = arith.subf %380, %420 : vector<2x2xf32>
    %422 = arith.mulf %417, %421 : vector<2x2xf32>
    %423 = arith.addf %420, %422 : vector<2x2xf32>
    %424 = vector.extract_strided_slice %423 {offsets = [0, 0], sizes = [2, 1], strides = [1, 1]} : vector<2x2xf32> to vector<2x1xf32>
    %425 = vector.extract_strided_slice %423 {offsets = [0, 1], sizes = [2, 1], strides = [1, 1]} : vector<2x2xf32> to vector<2x1xf32>
    %426 = vector.broadcast %424 : vector<2x1xf32> to vector<2x2xf32>
    %427 = vector.broadcast %16 : vector<1x2xf32> to vector<2x2xf32>
    %428 = arith.mulf %426, %427 : vector<2x2xf32>
    %429 = vector.broadcast %424 : vector<2x1xf32> to vector<2x2xf32>
    %430 = vector.broadcast %18 : vector<1x2xf32> to vector<2x2xf32>
    %431 = arith.mulf %429, %430 : vector<2x2xf32>
    %432 = vector.broadcast %424 : vector<2x1xf32> to vector<2x2xf32>
    %433 = vector.broadcast %20 : vector<1x2xf32> to vector<2x2xf32>
    %434 = arith.mulf %432, %433 : vector<2x2xf32>
    %435 = vector.broadcast %25 : vector<1x2xf32> to vector<2x2xf32>
    %436 = arith.addf %434, %435 : vector<2x2xf32>
    %437 = vector.broadcast %425 : vector<2x1xf32> to vector<2x2xf32>
    %438 = vector.broadcast %17 : vector<1x2xf32> to vector<2x2xf32>
    %439 = arith.mulf %437, %438 : vector<2x2xf32>
    %440 = arith.addf %428, %439 : vector<2x2xf32>
    %441 = vector.broadcast %425 : vector<2x1xf32> to vector<2x2xf32>
    %442 = vector.broadcast %19 : vector<1x2xf32> to vector<2x2xf32>
    %443 = arith.mulf %441, %442 : vector<2x2xf32>
    %444 = arith.addf %431, %443 : vector<2x2xf32>
    %445 = vector.broadcast %425 : vector<2x1xf32> to vector<2x2xf32>
    %446 = vector.broadcast %21 : vector<1x2xf32> to vector<2x2xf32>
    %447 = arith.mulf %445, %446 : vector<2x2xf32>
    %448 = arith.addf %436, %447 : vector<2x2xf32>
    %449 = arith.addf %105, %440 : vector<2x2xf32>
    %450 = arith.negf %449 : vector<2x2xf32>
    %451 = math.exp %450 : vector<2x2xf32>
    %cst_45 = arith.constant 1.000000e+00 : f32
    %452 = vector.broadcast %cst_45 : f32 to vector<2x2xf32>
    %453 = arith.addf %452, %451 : vector<2x2xf32>
    %454 = arith.divf %452, %453 : vector<2x2xf32>
    %455 = arith.addf %113, %444 : vector<2x2xf32>
    %456 = arith.negf %455 : vector<2x2xf32>
    %457 = math.exp %456 : vector<2x2xf32>
    %cst_46 = arith.constant 1.000000e+00 : f32
    %458 = vector.broadcast %cst_46 : f32 to vector<2x2xf32>
    %459 = arith.addf %458, %457 : vector<2x2xf32>
    %460 = arith.divf %458, %459 : vector<2x2xf32>
    %461 = arith.mulf %454, %448 : vector<2x2xf32>
    %462 = arith.addf %121, %461 : vector<2x2xf32>
    %463 = math.tanh %462 : vector<2x2xf32>
    %464 = arith.subf %423, %463 : vector<2x2xf32>
    %465 = arith.mulf %460, %464 : vector<2x2xf32>
    %466 = arith.addf %463, %465 : vector<2x2xf32>
    %cst_47 = arith.constant 0.000000e+00 : f32
    %467 = vector.broadcast %cst_47 : f32 to vector<2x2xf32>
    %468 = arith.maximumf %466, %467 : vector<2x2xf32>
    %469 = vector.extract_strided_slice %468 {offsets = [0, 0], sizes = [2, 1], strides = [1, 1]} : vector<2x2xf32> to vector<2x1xf32>
    %470 = vector.extract_strided_slice %468 {offsets = [0, 1], sizes = [2, 1], strides = [1, 1]} : vector<2x2xf32> to vector<2x1xf32>
    %471 = vector.extract_strided_slice %26 {offsets = [0, 0], sizes = [1, 128], strides = [1, 1]} : vector<2x128xf32> to vector<1x128xf32>
    %472 = vector.broadcast %469 : vector<2x1xf32> to vector<2x128xf32>
    %473 = vector.broadcast %471 : vector<1x128xf32> to vector<2x128xf32>
    %474 = arith.mulf %472, %473 : vector<2x128xf32>
    %475 = vector.broadcast %27 : vector<1x128xf32> to vector<2x128xf32>
    %476 = arith.addf %474, %475 : vector<2x128xf32>
    %477 = vector.extract_strided_slice %26 {offsets = [1, 0], sizes = [1, 128], strides = [1, 1]} : vector<2x128xf32> to vector<1x128xf32>
    %478 = vector.broadcast %470 : vector<2x1xf32> to vector<2x128xf32>
    %479 = vector.broadcast %477 : vector<1x128xf32> to vector<2x128xf32>
    %480 = arith.mulf %478, %479 : vector<2x128xf32>
    %481 = arith.addf %476, %480 : vector<2x128xf32>
    %cst_48 = arith.constant 0.000000e+00 : f32
    %482 = vector.broadcast %cst_48 : f32 to vector<2x128xf32>
    %483 = arith.maximumf %481, %482 : vector<2x128xf32>
    %484 = vector.broadcast %28 : vector<1x128xf32> to vector<2x128xf32>
    %485 = arith.mulf %483, %484 : vector<2x128xf32>
    %cst_49 = arith.constant dense<0.000000e+00> : vector<2xf32>
    %486 = vector.multi_reduction <add>, %485, %cst_49 [1] : vector<2x128xf32> to vector<2xf32>
    %487 = vector.shape_cast %486 : vector<2xf32> to vector<2x1xf32>
    %488 = vector.shape_cast %487 : vector<2x1xf32> to vector<2x1xf32>
    %489 = vector.broadcast %488 : vector<2x1xf32> to vector<2x128xf32>
    %490 = vector.broadcast %29 : vector<1x128xf32> to vector<2x128xf32>
    %491 = arith.addf %489, %490 : vector<2x128xf32>
    %c0_50 = arith.constant 0 : index
    %c0_51 = arith.constant 0 : index
    %492 = vector.load %arg2[%c0_50, %c0_51] : memref<2x128xf32, #tpu.memory_space<vmem>>, vector<2x128xf32>
    tpu.vector_store %arg2[%c0_50, %c0_51], %491 {strides = array<i32>} : memref<2x128xf32, #tpu.memory_space<vmem>>, vector<2x128xf32>,
    return
  }
}

</mosaic_0001>

<llo_original>
// kernel: gru1_forward.1
$region0: #{gru1_forward.1}
  #allocation0 [shape = 'u32[]', space=smem, size = 0x4, offset = 0x4, fixed_abs, tag = 'smem constant byte address 0x4 - core index']
  #allocation1 [shape = 'u32[144,128]{1,0:T(1,128)}', space=vmem, size = 0x12000, scoped, tag = 'internal scratch']
  %s0 = inlined_call_operand.vmem [shape: f32[16,5], index: 0, kind: input, shape index: {}]
  %s1 = inlined_call_operand.vmem [shape: f32[32,128], index: 1, kind: input, shape index: {}]
  %s2 = inlined_call_operand.vmem [shape: f32[2,128], index: 2, kind: output, shape index: {}]
  %s3 = sld [smem:[#allocation0]]
  $region18: #{gru1_forward.1} parent=0
    _
  %s5 = ssub.s32 1, %s3
  %s6 = scalar_select 0, %s5, %s3
  // Predicated region
  $region2: #{gru1_forward.1} parent=0 // pred_check
    _
  $region3: #{gru1_forward.1} parent=0 // pred_check_branch
    %8 = sbr.rel (0) target = $region5
  $region4: #{gru1_forward.1} parent=0 // pred_region
    _
  $region5: #{gru1_forward.1} parent=0 // pred_fallthru
    _
  // Predicated region
  $region6: #{gru1_forward.1} parent=0 // pred_check
    _
  $region7: #{gru1_forward.1} parent=0 // pred_check_branch
    %10 = sbr.rel (0) target = $region9
  $region8: #{gru1_forward.1} parent=0 // pred_region
    _
  $region9: #{gru1_forward.1} parent=0 // pred_fallthru
    _
  %v11 = vld [vmem:[%s0] sm:$0xff]
  %v12 = vld [vmem:[%s0 + $0x8] sm:$0xff]
  %v13 = vld [vmem:[%s1] sm:$0x1]
  %v14 = vld [vmem:[%s1 + $0x1] sm:$0x1]
  %v15 = vld [vmem:[%s1 + $0x2] sm:$0x1]
  %v16 = vld [vmem:[%s1 + $0x3] sm:$0x1]
  %v17 = vld [vmem:[%s1 + $0x4] sm:$0x1]
  %v18 = vld [vmem:[%s1 + $0x5] sm:$0x1]
  %v19 = vld [vmem:[%s1 + $0x6] sm:$0x1]
  %v20 = vld [vmem:[%s1 + $0x7] sm:$0x1]
  %v21 = vld [vmem:[%s1 + $0x8] sm:$0x1]
  %v22 = vld [vmem:[%s1 + $0x9] sm:$0x1]
  %v23 = vld [vmem:[%s1 + $0xa] sm:$0x1]
  %v24 = vld [vmem:[%s1 + $0xb] sm:$0x1]
  %v25 = vld [vmem:[%s1 + $0xc] sm:$0x1]
  %v26 = vld [vmem:[%s1 + $0xd] sm:$0x1]
  %v27 = vld [vmem:[%s1 + $0xe] sm:$0x1]
  %v28 = vld [vmem:[%s1 + $0xf] sm:$0x1]
  %v29 = vld [vmem:[%s1 + $0x10] sm:$0x1]
  %v30 = vld [vmem:[%s1 + $0x11] sm:$0x1]
  %v31 = vld [vmem:[%s1 + $0x12] sm:$0x1]
  %v32 = vld [vmem:[%s1 + $0x13] sm:$0x1]
  %v33 = vld [vmem:[%s1 + $0x14] sm:$0x1]
  %v34 = vld [vmem:[%s1 + $0x15] sm:$0x1]
  %v35 = vld [vmem:[%s1 + $0x16] sm:$0x1]
  %v36 = vld [vmem:[%s1 + $0x17] sm:$0x1]
  %v37 = vld [vmem:[%s1 + $0x18] sm:$0x1]
  %v38 = vld [vmem:[%s1 + $0x19] sm:$0x3]
  %v39 = vld [vmem:[%s1 + $0x1b] sm:$0x1]
  %v40 = vld [vmem:[%s1 + $0x1c] sm:$0x1]
  %v41 = vld [vmem:[%s1 + $0x1d] sm:$0x1]
  %43 = vset.pattern.permute.xlu0 0
  %44 = vperm.xlu0 %43, %v11
  %v45 = vpop.permute.xlu0 %44
  %48 = vset.pattern.permute.xlu0 0
  %49 = vperm.xlu0 %48, %v12
  %v50 = vpop.permute.xlu0 %49
  %v52 = vlaneseq
  %v53 = vshrl.u32 %v52, 7
  %v54 = vsub.s32 0, %v53
  %v55 = vrot.slane %v13, %v54
  %v56 = vmul.f32 %v45, %v55
  %v57 = vmul.f32 %v50, %v55
  %v58 = vlaneseq
  %v59 = vshrl.u32 %v58, 7
  %v60 = vsub.s32 0, %v59
  %v61 = vrot.slane %v34, %v60
  %v62 = vadd.f32 %v56, %v61
  %v63 = vadd.f32 %v57, %v61
  %64 = vset.pattern.permute.xlu0 1
  %65 = vperm.xlu0 %64, %v11
  %v66 = vpop.permute.xlu0 %65
  %68 = vset.pattern.permute.xlu0 1
  %69 = vperm.xlu0 %68, %v12
  %v70 = vpop.permute.xlu0 %69
  %v72 = vlaneseq
  %v73 = vshrl.u32 %v72, 7
  %v74 = vsub.s32 0, %v73
  %v75 = vrot.slane %v14, %v74
  %v76 = vmul.f32 %v66, %v75
  %v77 = vmul.f32 %v70, %v75
  %v78 = vadd.f32 %v62, %v76
  %v79 = vadd.f32 %v63, %v77
  %80 = vset.pattern.permute.xlu0 2
  %81 = vperm.xlu0 %80, %v11
  %v82 = vpop.permute.xlu0 %81
  %84 = vset.pattern.permute.xlu0 2
  %85 = vperm.xlu0 %84, %v12
  %v86 = vpop.permute.xlu0 %85
  %v88 = vlaneseq
  %v89 = vshrl.u32 %v88, 7
  %v90 = vsub.s32 0, %v89
  %v91 = vrot.slane %v15, %v90
  %v92 = vmul.f32 %v82, %v91
  %v93 = vmul.f32 %v86, %v91
  %v94 = vadd.f32 %v78, %v92
  %v95 = vadd.f32 %v79, %v93
  %96 = vset.pattern.permute.xlu0 3
  %97 = vperm.xlu0 %96, %v11
  %v98 = vpop.permute.xlu0 %97
  %100 = vset.pattern.permute.xlu0 3
  %101 = vperm.xlu0 %100, %v12
  %v102 = vpop.permute.xlu0 %101
  %v104 = vlaneseq
  %v105 = vshrl.u32 %v104, 7
  %v106 = vsub.s32 0, %v105
  %v107 = vrot.slane %v16, %v106
  %v108 = vmul.f32 %v98, %v107
  %v109 = vmul.f32 %v102, %v107
  %v110 = vadd.f32 %v94, %v108
  %v111 = vadd.f32 %v95, %v109
  %112 = vset.pattern.permute.xlu0 4
  %113 = vperm.xlu0 %112, %v11
  %v114 = vpop.permute.xlu0 %113
  %116 = vset.pattern.permute.xlu0 4
  %117 = vperm.xlu0 %116, %v12
  %v118 = vpop.permute.xlu0 %117
  %v120 = vlaneseq
  %v121 = vshrl.u32 %v120, 7
  %v122 = vsub.s32 0, %v121
  %v123 = vrot.slane %v17, %v122
  %v124 = vmul.f32 %v114, %v123
  %v125 = vmul.f32 %v118, %v123
  %v126 = vadd.f32 %v110, %v124
  %v127 = vadd.f32 %v111, %v125
  %v128 = vlaneseq
  %v129 = vshrl.u32 %v128, 7
  %v130 = vsub.s32 0, %v129
  %v131 = vrot.slane %v18, %v130
  %v132 = vmul.f32 %v45, %v131
  %v133 = vmul.f32 %v50, %v131
  %v134 = vlaneseq
  %v135 = vshrl.u32 %v134, 7
  %v136 = vsub.s32 0, %v135
  %v137 = vrot.slane %v35, %v136
  %v138 = vadd.f32 %v132, %v137
  %v139 = vadd.f32 %v133, %v137
  %v140 = vlaneseq
  %v141 = vshrl.u32 %v140, 7
  %v142 = vsub.s32 0, %v141
  %v143 = vrot.slane %v19, %v142
  %v144 = vmul.f32 %v66, %v143
  %v145 = vmul.f32 %v70, %v143
  %v146 = vadd.f32 %v138, %v144
  %v147 = vadd.f32 %v139, %v145
  %v148 = vlaneseq
  %v149 = vshrl.u32 %v148, 7
  %v150 = vsub.s32 0, %v149
  %v151 = vrot.slane %v20, %v150
  %v152 = vmul.f32 %v82, %v151
  %v153 = vmul.f32 %v86, %v151
  %v154 = vadd.f32 %v146, %v152
  %v155 = vadd.f32 %v147, %v153
  %v156 = vlaneseq
  %v157 = vshrl.u32 %v156, 7
  %v158 = vsub.s32 0, %v157
  %v159 = vrot.slane %v21, %v158
  %v160 = vmul.f32 %v98, %v159
  %v161 = vmul.f32 %v102, %v159
  %v162 = vadd.f32 %v154, %v160
  %v163 = vadd.f32 %v155, %v161
  %v164 = vlaneseq
  %v165 = vshrl.u32 %v164, 7
  %v166 = vsub.s32 0, %v165
  %v167 = vrot.slane %v22, %v166
  %v168 = vmul.f32 %v114, %v167
  %v169 = vmul.f32 %v118, %v167
  %v170 = vadd.f32 %v162, %v168
  %v171 = vadd.f32 %v163, %v169
  %v172 = vlaneseq
  %v173 = vshrl.u32 %v172, 7
  %v174 = vsub.s32 0, %v173
  %v175 = vrot.slane %v23, %v174
  %v176 = vmul.f32 %v45, %v175
  %v177 = vmul.f32 %v50, %v175
  %v178 = vlaneseq
  %v179 = vshrl.u32 %v178, 7
  %v180 = vsub.s32 0, %v179
  %v181 = vrot.slane %v36, %v180
  %v182 = vadd.f32 %v176, %v181
  %v183 = vadd.f32 %v177, %v181
  %v184 = vlaneseq
  %v185 = vshrl.u32 %v184, 7
  %v186 = vsub.s32 0, %v185
  %v187 = vrot.slane %v24, %v186
  %v188 = vmul.f32 %v66, %v187
  %v189 = vmul.f32 %v70, %v187
  %v190 = vadd.f32 %v182, %v188
  %v191 = vadd.f32 %v183, %v189
  %v192 = vlaneseq
  %v193 = vshrl.u32 %v192, 7
  %v194 = vsub.s32 0, %v193
  %v195 = vrot.slane %v25, %v194
  %v196 = vmul.f32 %v82, %v195
  %v197 = vmul.f32 %v86, %v195
  %v198 = vadd.f32 %v190, %v196
  %v199 = vadd.f32 %v191, %v197
  %v200 = vlaneseq
  %v201 = vshrl.u32 %v200, 7
  %v202 = vsub.s32 0, %v201
  %v203 = vrot.slane %v26, %v202
  %v204 = vmul.f32 %v98, %v203
  %v205 = vmul.f32 %v102, %v203
  %v206 = vadd.f32 %v198, %v204
  %v207 = vadd.f32 %v199, %v205
  %v208 = vlaneseq
  %v209 = vshrl.u32 %v208, 7
  %v210 = vsub.s32 0, %v209
  %v211 = vrot.slane %v27, %v210
  %v212 = vmul.f32 %v114, %v211
  %v213 = vmul.f32 %v118, %v211
  %v214 = vadd.f32 %v206, %v212
  %v215 = vadd.f32 %v207, %v213
  %v216 = vlaneseq
  %v217 = vshrl.u32 %v216, 7
  %v218 = vsub.s32 0, %v217
  %v219 = vrot.slane %v28, %v218
  %v220 = vmul.f32 %v219, 0.0
  %v221 = vlaneseq
  %v222 = vshrl.u32 %v221, 7
  %v223 = vsub.s32 0, %v222
  %v224 = vrot.slane %v30, %v223
  %v225 = vmul.f32 %v224, 0.0
  %v226 = vlaneseq
  %v227 = vshrl.u32 %v226, 7
  %v228 = vsub.s32 0, %v227
  %v229 = vrot.slane %v32, %v228
  %v230 = vmul.f32 %v229, 0.0
  %v231 = vlaneseq
  %v232 = vshrl.u32 %v231, 7
  %v233 = vsub.s32 0, %v232
  %v234 = vrot.slane %v37, %v233
  %v235 = vadd.f32 %v230, %v234
  %v236 = vlaneseq
  %v237 = vshrl.u32 %v236, 7
  %v238 = vsub.s32 0, %v237
  %v239 = vrot.slane %v29, %v238
  %v240 = vmul.f32 %v239, 0.0
  %v241 = vadd.f32 %v220, %v240
  %v242 = vlaneseq
  %v243 = vshrl.u32 %v242, 7
  %v244 = vsub.s32 0, %v243
  %v245 = vrot.slane %v31, %v244
  %v246 = vmul.f32 %v245, 0.0
  %v247 = vadd.f32 %v225, %v246
  %v248 = vlaneseq
  %v249 = vshrl.u32 %v248, 7
  %v250 = vsub.s32 0, %v249
  %v251 = vrot.slane %v33, %v250
  %v252 = vmul.f32 %v251, 0.0
  %v253 = vadd.f32 %v235, %v252
  %v254 = vadd.f32 %v126, %v241
  %v255 = vxor.u32 %v254, 2147483648
  %v256 = vmul.f32 %v255, 1.442695
  %v257 = vpow.pop %v256
  %v258 = vadd.f32 %v257, 1.0
  %v259 = vrcp.pop %v258
  %v260 = vmul.f32 1.0, %v259
  %v261 = vadd.f32 %v170, %v247
  %v262 = vxor.u32 %v261, 2147483648
  %v263 = vmul.f32 %v262, 1.442695
  %v264 = vpow.pop %v263
  %v265 = vadd.f32 %v264, 1.0
  %v266 = vrcp.pop %v265
  %v267 = vmul.f32 1.0, %v266
  %v268 = vmul.f32 %v260, %v253
  %v269 = vadd.f32 %v214, %v268
  %v270 = vtanh.pop %v269
  %v271 = vsub.f32 0.0, %v270
  %v272 = vmul.f32 %v267, %v271
  %v273 = vadd.f32 %v270, %v272
  %275 = vset.pattern.permute.xlu0 0
  %276 = vperm.xlu0 %275, %v273
  %v277 = vpop.permute.xlu0 %276
  %v279 = vmul.f32 %v277, %v219
  %v280 = vmul.f32 %v277, %v224
  %v281 = vmul.f32 %v277, %v229
  %v282 = vadd.f32 %v281, %v234
  %283 = vset.pattern.permute.xlu0 1
  %284 = vperm.xlu0 %283, %v273
  %v285 = vpop.permute.xlu0 %284
  %v287 = vmul.f32 %v285, %v239
  %v288 = vadd.f32 %v279, %v287
  %v289 = vmul.f32 %v285, %v245
  %v290 = vadd.f32 %v280, %v289
  %v291 = vmul.f32 %v285, %v251
  %v292 = vadd.f32 %v282, %v291
  %v294 = vrot.slane %v288, 6
  %v296 = vadd.f32 %v126, %v294
  %v297 = vxor.u32 %v296, 2147483648
  %v298 = vmul.f32 %v297, 1.442695
  %v299 = vpow.pop %v298
  %v300 = vadd.f32 %v299, 1.0
  %v301 = vrcp.pop %v300
  %v302 = vmul.f32 1.0, %v301
  %v304 = vrot.slane %v290, 6
  %v306 = vadd.f32 %v170, %v304
  %v307 = vxor.u32 %v306, 2147483648
  %v308 = vmul.f32 %v307, 1.442695
  %v309 = vpow.pop %v308
  %v310 = vadd.f32 %v309, 1.0
  %v311 = vrcp.pop %v310
  %v312 = vmul.f32 1.0, %v311
  %v314 = vrot.slane %v292, 6
  %v316 = vmul.f32 %v302, %v314
  %v317 = vadd.f32 %v214, %v316
  %v318 = vtanh.pop %v317
  %v320 = vrot.slane %v318, 2
  %v322 = vsub.f32 %v273, %v320
  %v324 = vrot.slane %v322, 6
  %v326 = vmul.f32 %v312, %v324
  %v327 = vadd.f32 %v318, %v326
  %329 = vset.pattern.permute.xlu0 0
  %330 = vperm.xlu0 %329, %v327
  %v331 = vpop.permute.xlu0 %330
  %v333 = vmul.f32 %v331, %v219
  %v334 = vmul.f32 %v331, %v224
  %v335 = vmul.f32 %v331, %v229
  %v336 = vadd.f32 %v335, %v234
  %337 = vset.pattern.permute.xlu0 1
  %338 = vperm.xlu0 %337, %v327
  %v339 = vpop.permute.xlu0 %338
  %v341 = vmul.f32 %v339, %v239
  %v342 = vadd.f32 %v333, %v341
  %v343 = vmul.f32 %v339, %v245
  %v344 = vadd.f32 %v334, %v343
  %v345 = vmul.f32 %v339, %v251
  %v346 = vadd.f32 %v336, %v345
  %v348 = vrot.slane %v342, 6
  %v350 = vadd.f32 %v126, %v348
  %v351 = vxor.u32 %v350, 2147483648
  %v352 = vmul.f32 %v351, 1.442695
  %v353 = vpow.pop %v352
  %v354 = vadd.f32 %v353, 1.0
  %v355 = vrcp.pop %v354
  %v356 = vmul.f32 1.0, %v355
  %v358 = vrot.slane %v344, 6
  %v360 = vadd.f32 %v170, %v358
  %v361 = vxor.u32 %v360, 2147483648
  %v362 = vmul.f32 %v361, 1.442695
  %v363 = vpow.pop %v362
  %v364 = vadd.f32 %v363, 1.0
  %v365 = vrcp.pop %v364
  %v366 = vmul.f32 1.0, %v365
  %v368 = vrot.slane %v346, 6
  %v370 = vmul.f32 %v356, %v368
  %v371 = vadd.f32 %v214, %v370
  %v372 = vtanh.pop %v371
  %v374 = vrot.slane %v372, 2
  %v376 = vsub.f32 %v327, %v374
  %v378 = vrot.slane %v376, 6
  %v380 = vmul.f32 %v366, %v378
  %v381 = vadd.f32 %v372, %v380
  %383 = vset.pattern.permute.xlu0 0
  %384 = vperm.xlu0 %383, %v381
  %v385 = vpop.permute.xlu0 %384
  %v387 = vmul.f32 %v385, %v219
  %v388 = vmul.f32 %v385, %v224
  %v389 = vmul.f32 %v385, %v229
  %v390 = vadd.f32 %v389, %v234
  %391 = vset.pattern.permute.xlu0 1
  %392 = vperm.xlu0 %391, %v381
  %v393 = vpop.permute.xlu0 %392
  %v395 = vmul.f32 %v393, %v239
  %v396 = vadd.f32 %v387, %v395
  %v397 = vmul.f32 %v393, %v245
  %v398 = vadd.f32 %v388, %v397
  %v399 = vmul.f32 %v393, %v251
  %v400 = vadd.f32 %v390, %v399
  %v402 = vrot.slane %v396, 6
  %v404 = vadd.f32 %v126, %v402
  %v405 = vxor.u32 %v404, 2147483648
  %v406 = vmul.f32 %v405, 1.442695
  %v407 = vpow.pop %v406
  %v408 = vadd.f32 %v407, 1.0
  %v409 = vrcp.pop %v408
  %v410 = vmul.f32 1.0, %v409
  %v412 = vrot.slane %v398, 6
  %v414 = vadd.f32 %v170, %v412
  %v415 = vxor.u32 %v414, 2147483648
  %v416 = vmul.f32 %v415, 1.442695
  %v417 = vpow.pop %v416
  %v418 = vadd.f32 %v417, 1.0
  %v419 = vrcp.pop %v418
  %v420 = vmul.f32 1.0, %v419
  %v422 = vrot.slane %v400, 6
  %v424 = vmul.f32 %v410, %v422
  %v425 = vadd.f32 %v214, %v424
  %v426 = vtanh.pop %v425
  %v428 = vrot.slane %v426, 2
  %v430 = vsub.f32 %v381, %v428
  %v432 = vrot.slane %v430, 6
  %v434 = vmul.f32 %v420, %v432
  %v435 = vadd.f32 %v426, %v434
  %437 = vset.pattern.permute.xlu0 0
  %438 = vperm.xlu0 %437, %v435
  %v439 = vpop.permute.xlu0 %438
  %v441 = vmul.f32 %v439, %v219
  %v442 = vmul.f32 %v439, %v224
  %v443 = vmul.f32 %v439, %v229
  %v444 = vadd.f32 %v443, %v234
  %445 = vset.pattern.permute.xlu0 1
  %446 = vperm.xlu0 %445, %v435
  %v447 = vpop.permute.xlu0 %446
  %v449 = vmul.f32 %v447, %v239
  %v450 = vadd.f32 %v441, %v449
  %v451 = vmul.f32 %v447, %v245
  %v452 = vadd.f32 %v442, %v451
  %v453 = vmul.f32 %v447, %v251
  %v454 = vadd.f32 %v444, %v453
  %v456 = vrot.slane %v450, 6
  %v458 = vadd.f32 %v127, %v456
  %v459 = vxor.u32 %v458, 2147483648
  %v460 = vmul.f32 %v459, 1.442695
  %v461 = vpow.pop %v460
  %v462 = vadd.f32 %v461, 1.0
  %v463 = vrcp.pop %v462
  %v464 = vmul.f32 1.0, %v463
  %v466 = vrot.slane %v452, 6
  %v468 = vadd.f32 %v171, %v466
  %v469 = vxor.u32 %v468, 2147483648
  %v470 = vmul.f32 %v469, 1.442695
  %v471 = vpow.pop %v470
  %v472 = vadd.f32 %v471, 1.0
  %v473 = vrcp.pop %v472
  %v474 = vmul.f32 1.0, %v473
  %v476 = vrot.slane %v454, 6
  %v478 = vmul.f32 %v464, %v476
  %v479 = vadd.f32 %v215, %v478
  %v480 = vtanh.pop %v479
  %v482 = vrot.slane %v480, 2
  %v484 = vsub.f32 %v435, %v482
  %v486 = vrot.slane %v484, 6
  %v488 = vmul.f32 %v474, %v486
  %v489 = vadd.f32 %v480, %v488
  %491 = vset.pattern.permute.xlu0 0
  %492 = vperm.xlu0 %491, %v489
  %v493 = vpop.permute.xlu0 %492
  %v495 = vmul.f32 %v493, %v219
  %v496 = vmul.f32 %v493, %v224
  %v497 = vmul.f32 %v493, %v229
  %v498 = vadd.f32 %v497, %v234
  %499 = vset.pattern.permute.xlu0 1
  %500 = vperm.xlu0 %499, %v489
  %v501 = vpop.permute.xlu0 %500
  %v503 = vmul.f32 %v501, %v239
  %v504 = vadd.f32 %v495, %v503
  %v505 = vmul.f32 %v501, %v245
  %v506 = vadd.f32 %v496, %v505
  %v507 = vmul.f32 %v501, %v251
  %v508 = vadd.f32 %v498, %v507
  %v510 = vrot.slane %v504, 6
  %v512 = vadd.f32 %v127, %v510
  %v513 = vxor.u32 %v512, 2147483648
  %v514 = vmul.f32 %v513, 1.442695
  %v515 = vpow.pop %v514
  %v516 = vadd.f32 %v515, 1.0
  %v517 = vrcp.pop %v516
  %v518 = vmul.f32 1.0, %v517
  %v520 = vrot.slane %v506, 6
  %v522 = vadd.f32 %v171, %v520
  %v523 = vxor.u32 %v522, 2147483648
  %v524 = vmul.f32 %v523, 1.442695
  %v525 = vpow.pop %v524
  %v526 = vadd.f32 %v525, 1.0
  %v527 = vrcp.pop %v526
  %v528 = vmul.f32 1.0, %v527
  %v530 = vrot.slane %v508, 6
  %v532 = vmul.f32 %v518, %v530
  %v533 = vadd.f32 %v215, %v532
  %v534 = vtanh.pop %v533
  %v536 = vrot.slane %v534, 2
  %v538 = vsub.f32 %v489, %v536
  %v540 = vrot.slane %v538, 6
  %v542 = vmul.f32 %v528, %v540
  %v543 = vadd.f32 %v534, %v542
  %545 = vset.pattern.permute.xlu0 0
  %546 = vperm.xlu0 %545, %v543
  %v547 = vpop.permute.xlu0 %546
  %v549 = vmul.f32 %v547, %v219
  %v550 = vmul.f32 %v547, %v224
  %v551 = vmul.f32 %v547, %v229
  %v552 = vadd.f32 %v551, %v234
  %553 = vset.pattern.permute.xlu0 1
  %554 = vperm.xlu0 %553, %v543
  %v555 = vpop.permute.xlu0 %554
  %v557 = vmul.f32 %v555, %v239
  %v558 = vadd.f32 %v549, %v557
  %v559 = vmul.f32 %v555, %v245
  %v560 = vadd.f32 %v550, %v559
  %v561 = vmul.f32 %v555, %v251
  %v562 = vadd.f32 %v552, %v561
  %v564 = vrot.slane %v558, 6
  %v566 = vadd.f32 %v127, %v564
  %v567 = vxor.u32 %v566, 2147483648
  %v568 = vmul.f32 %v567, 1.442695
  %v569 = vpow.pop %v568
  %v570 = vadd.f32 %v569, 1.0
  %v571 = vrcp.pop %v570
  %v572 = vmul.f32 1.0, %v571
  %v574 = vrot.slane %v560, 6
  %v576 = vadd.f32 %v171, %v574
  %v577 = vxor.u32 %v576, 2147483648
  %v578 = vmul.f32 %v577, 1.442695
  %v579 = vpow.pop %v578
  %v580 = vadd.f32 %v579, 1.0
  %v581 = vrcp.pop %v580
  %v582 = vmul.f32 1.0, %v581
  %v584 = vrot.slane %v562, 6
  %v586 = vmul.f32 %v572, %v584
  %v587 = vadd.f32 %v215, %v586
  %v588 = vtanh.pop %v587
  %v590 = vrot.slane %v588, 2
  %v592 = vsub.f32 %v543, %v590
  %v594 = vrot.slane %v592, 6
  %v596 = vmul.f32 %v582, %v594
  %v597 = vadd.f32 %v588, %v596
  %599 = vset.pattern.permute.xlu0 0
  %600 = vperm.xlu0 %599, %v597
  %v601 = vpop.permute.xlu0 %600
  %v603 = vmul.f32 %v601, %v219
  %v604 = vmul.f32 %v601, %v224
  %v605 = vmul.f32 %v601, %v229
  %v606 = vadd.f32 %v605, %v234
  %607 = vset.pattern.permute.xlu0 1
  %608 = vperm.xlu0 %607, %v597
  %v609 = vpop.permute.xlu0 %608
  %v611 = vmul.f32 %v609, %v239
  %v612 = vadd.f32 %v603, %v611
  %v613 = vmul.f32 %v609, %v245
  %v614 = vadd.f32 %v604, %v613
  %v615 = vmul.f32 %v609, %v251
  %v616 = vadd.f32 %v606, %v615
  %v618 = vrot.slane %v612, 6
  %v620 = vadd.f32 %v127, %v618
  %v621 = vxor.u32 %v620, 2147483648
  %v622 = vmul.f32 %v621, 1.442695
  %v623 = vpow.pop %v622
  %v624 = vadd.f32 %v623, 1.0
  %v625 = vrcp.pop %v624
  %v626 = vmul.f32 1.0, %v625
  %v628 = vrot.slane %v614, 6
  %v630 = vadd.f32 %v171, %v628
  %v631 = vxor.u32 %v630, 2147483648
  %v632 = vmul.f32 %v631, 1.442695
  %v633 = vpow.pop %v632
  %v634 = vadd.f32 %v633, 1.0
  %v635 = vrcp.pop %v634
  %v636 = vmul.f32 1.0, %v635
  %v638 = vrot.slane %v616, 6
  %v640 = vmul.f32 %v626, %v638
  %v641 = vadd.f32 %v215, %v640
  %v642 = vtanh.pop %v641
  %v644 = vrot.slane %v642, 2
  %v646 = vsub.f32 %v597, %v644
  %v648 = vrot.slane %v646, 6
  %v650 = vmul.f32 %v636, %v648
  %v651 = vadd.f32 %v642, %v650
  %v652 = vmax.f32 %v651, 0.0
  %654 = vset.pattern.permute.xlu0 0
  %655 = vperm.xlu0 %654, %v652
  %v656 = vpop.permute.xlu0 %655
  %v658 = vlaneseq
  %v659 = vshrl.u32 %v658, 7
  %v660 = vsub.s32 0, %v659
  %v661 = vrot.slane %v38, %v660
  %v662 = vmul.f32 %v656, %v661
  %v663 = vlaneseq
  %v664 = vshrl.u32 %v663, 7
  %v665 = vsub.s32 0, %v664
  %v666 = vrot.slane %v39, %v665
  %v667 = vadd.f32 %v662, %v666
  %668 = vset.pattern.permute.xlu0 1
  %669 = vperm.xlu0 %668, %v652
  %v670 = vpop.permute.xlu0 %669
  %v672 = vlaneseq
  %v673 = vshrl.u32 %v672, 7
  %v674 = vsub.s32 1, %v673
  %v675 = vrot.slane %v38, %v674
  %v676 = vmul.f32 %v670, %v675
  %v677 = vadd.f32 %v667, %v676
  %v678 = vmax.f32 %v677, 0.0
  %v679 = vlaneseq
  %v680 = vshrl.u32 %v679, 7
  %v681 = vsub.s32 0, %v680
  %v682 = vrot.slane %v40, %v681
  %v683 = vmul.f32 %v678, %v682
  %vm684 = vcmask 1047558
  %v685 = vsel %vm684, %v683, 0.0
  %686 = vadd.xlane.f32.xlu0 %v685
  %v687 = vpop.xlane.xlu0 %686
  %v688 = vlaneseq
  %v689 = vshrl.u32 %v688, 7
  %v690 = vsub.s32 0, %v689
  %v691 = vrot.slane %v41, %v690
  %v692 = vadd.f32 %v687, %v691
  %693 = vst [vmem:[%s2 - $0x6] sm:$0xc0] %v692
  // Predicated region
  $region10: #{gru1_forward.1} parent=0 // pred_check
    _
  $region11: #{gru1_forward.1} parent=0 // pred_check_branch
    %695 = sbr.rel (0) target = $region13
  $region12: #{gru1_forward.1} parent=0 // pred_region
    _
  $region13: #{gru1_forward.1} parent=0 // pred_fallthru
    _
  // Predicated region
  $region14: #{gru1_forward.1} parent=0 // pred_check
    _
  $region15: #{gru1_forward.1} parent=0 // pred_check_branch
    %697 = sbr.rel (0) target = $region17
  $region16: #{gru1_forward.1} parent=0 // pred_region
    _
  $region17: #{gru1_forward.1} parent=0 // pred_fallthru
    _

</llo_original>
